<compile_context>
chip_gen: v6e
topology: v6e:2x2x1
jax: 0.10.0
libtpu: 0.0.40
codegen_flags: <defaults>
</compile_context>

<pallas_src>
import functools

import jax
import jax.numpy as jnp
from jax import lax
from jax.experimental import pallas as pl
from jax.experimental.pallas import tpu as pltpu

# ---- problem sizes (small, consistent with the module / ViT usage) ----
B = 2            # batch
N = 8            # sequence length (tokens)
C_IN = 32        # in_features
C_HID = 128      # hidden_features (mlp_ratio = 4)
C_OUT = 32       # out_features (defaults to in_features)

_SQRT_2_OVER_PI = 0.7978845608028654


def _gelu_tanh(x):
    # tanh-approx GELU: 0.5*x*(1 + tanh(sqrt(2/pi)*(x + 0.044715*x^3)))
    return 0.5 * x * (1.0 + jnp.tanh(_SQRT_2_OVER_PI * (x + 0.044715 * x * x * x)))


def _round_up(v, m):
    return (v + m - 1) // m * m


def _param_layout(cin, cout):
    """Row offsets of each parameter inside the packed (rows, C_HID) slab."""
    r_w1 = 0                                # rows [r_w1, r_w1+cin)  : fc1 weightᵀ (cin, chid)
    r_w2 = cin                              # rows [r_w2, r_w2+cout) : fc2 weight, native (cout, chid)
    r_b1 = _round_up(cin + cout, 8)         # row  r_b1              : fc1 bias (chid,)
    r_b2 = r_b1 + 8                         # row  r_b2, lanes [0,cout) : fc2 bias
    rows = r_b2 + 8                         # pad total rows to a multiple of 8
    return r_w1, r_w2, r_b1, r_b2, rows


def pack_mlp_params(w1, b1, w2, b2):
    """Pack PyTorch-layout parameters into one lane-dense VMEM slab.

    w1: (C_HID, C_IN), b1: (C_HID,), w2: (C_OUT, C_HID), b2: (C_OUT,)
    Do this ONCE outside the hot path if the weights are static.
    """
    chid, cin = w1.shape
    cout = w2.shape[0]
    r_w1, r_w2, r_b1, r_b2, rows = _param_layout(cin, cout)
    p = jnp.zeros((rows, chid), dtype=jnp.float32)
    p = p.at[r_w1:r_w1 + cin, :].set(w1.T.astype(jnp.float32))   # fc1 weight, (in, out)
    p = p.at[r_w2:r_w2 + cout, :].set(w2.astype(jnp.float32))    # fc2 weight, native (out, in)
    p = p.at[r_b1, :].set(b1.astype(jnp.float32))                # fc1 bias
    p = p.at[r_b2, :cout].set(b2.astype(jnp.float32))            # fc2 bias (zero-padded to chid lanes)
    return p


def _mlp_kernel(x_ref, p_ref, o_ref, *, cin, cout, r_w1, r_w2, r_b1, r_b2):
    """Single-shot MLP over all tokens.

    x_ref : (M, C_IN)        flattened tokens
    p_ref : (rows, C_HID)    packed parameter slab (see pack_mlp_params)
    o_ref : (M, C_OUT)       output
    """
    x = x_ref[...]                                           # (M, C_IN)

    # Static sub-views of the packed parameter slab (no runtime cost).
    w1t = p_ref[r_w1:r_w1 + cin, :]                          # (C_IN,  C_HID)
    w2 = p_ref[r_w2:r_w2 + cout, :]                          # (C_OUT, C_HID)  native, lane-dense
    b1 = p_ref[r_b1:r_b1 + 1, :]                             # (1, C_HID)
    b2 = p_ref[r_b2:r_b2 + 1, 0:cout]                        # (1, C_OUT)

    # fc1 + bias (single MXU push, f32 accumulation)
    h = jnp.dot(x, w1t, preferred_element_type=jnp.float32) + b1   # (M, C_HID)

    # activation (GELU, tanh approximation) — dropout(p=0) is identity
    h = _gelu_tanh(h)

    # fc2 + bias: contract with the native (C_OUT, C_HID) weight (h @ w2.T)
    y = lax.dot_general(h, w2,
                        dimension_numbers=(((1,), (1,)), ((), ())),
                        preferred_element_type=jnp.float32)        # (M, C_OUT)
    y = y + b2

    o_ref[...] = y.astype(o_ref.dtype)


def mlp_forward_packed(x, params, out_features):
    """x: (B, N, C_in); params: packed slab from pack_mlp_params."""
    Bsz, Nseq, cin = x.shape
    chid = params.shape[1]
    cout = out_features
    r_w1, r_w2, r_b1, r_b2, rows = _param_layout(cin, cout)
    assert params.shape[0] == rows, "packed params do not match expected layout"

    M = Bsz * Nseq
    x2d = x.reshape(M, cin)                 # flatten batch*tokens (wrapper-side plumbing only)

    kernel = functools.partial(_mlp_kernel, cin=cin, cout=cout,
                               r_w1=r_w1, r_w2=r_w2, r_b1=r_b1, r_b2=r_b2)

    itemsize = jnp.dtype(jnp.float32).itemsize
    cost = pl.CostEstimate(
        flops=2 * M * (cin * chid + chid * cout),
        transcendentals=M * chid,                         # one tanh per hidden element
        bytes_accessed=(x2d.size + params.size + M * cout) * itemsize)

    y2d = pl.pallas_call(
        kernel,
        out_shape=jax.ShapeDtypeStruct((M, cout), x.dtype),
        # Single invocation (no grid): every operand is a full-array VMEM block.
        # Only 2 input DMAs: the tokens and the packed parameter slab.
        in_specs=[
            pl.BlockSpec(memory_space=pltpu.MemorySpace.VMEM),  # x2d
            pl.BlockSpec(memory_space=pltpu.MemorySpace.VMEM),  # packed params
        ],
        out_specs=pl.BlockSpec(memory_space=pltpu.MemorySpace.VMEM),
        cost_estimate=cost,
    )(x2d, params)

    return y2d.reshape(Bsz, Nseq, cout)


def mlp_forward(x, w1, b1, w2, b2):
    """Convenience wrapper taking PyTorch-layout parameters (packs per call)."""
    return mlp_forward_packed(x, pack_mlp_params(w1, b1, w2, b2), w2.shape[0])


def mlp_reference(x, w1, b1, w2, b2, *, exact_gelu=False):
    """Pure-JAX reference mirroring the PyTorch forward."""
    h = x @ w1.T + b1
    h = jax.nn.gelu(h, approximate=False) if exact_gelu else _gelu_tanh(h)
    return h @ w2.T + b2


if __name__ == "__main__":
    key = jax.random.PRNGKey(0)
    kx, k1w, k1b, k2w, k2b = jax.random.split(key, 5)

    x = jax.random.normal(kx, (B, N, C_IN), dtype=jnp.float32)
    # deterministic small random weights in PyTorch Linear layout (out, in)
    w1 = 0.02 * jax.random.normal(k1w, (C_HID, C_IN), dtype=jnp.float32)
    b1 = 0.02 * jax.random.normal(k1b, (C_HID,), dtype=jnp.float32)
    w2 = 0.02 * jax.random.normal(k2w, (C_OUT, C_HID), dtype=jnp.float32)
    b2 = 0.02 * jax.random.normal(k2b, (C_OUT,), dtype=jnp.float32)

    # Pack the parameters once, outside the hot path.
    params = pack_mlp_params(w1, b1, w2, b2)

    y = mlp_forward_packed(x, params, C_OUT)
    y = jax.block_until_ready(y)
    assert y.shape == (B, N, C_OUT)

    # Tight check vs the tanh-GELU reference (same activation formulation).
    y_ref_tanh = mlp_reference(x, w1, b1, w2, b2, exact_gelu=False)
    err_tanh = float(jnp.max(jnp.abs(y - y_ref_tanh)))
    assert err_tanh < 1e-4, f"mismatch vs tanh-GELU reference: {err_tanh}"

    # Loose check vs the exact erf-GELU (PyTorch nn.GELU default) reference.
    y_ref_erf = mlp_reference(x, w1, b1, w2, b2, exact_gelu=True)
    err_erf = float(jnp.max(jnp.abs(y - y_ref_erf)))
    assert err_erf < 1e-3, f"mismatch vs erf-GELU reference: {err_erf}"

    print("KERNEL_OK")
</pallas_src>

<mosaic_0001>
module attributes {stable_mosaic.version = 11 : i64} {
  func.func @_mlp_kernel(%arg0: memref<16x32xf32, #tpu.memory_space<vmem>>, %arg1: memref<80x128xf32, #tpu.memory_space<vmem>>, %arg2: memref<16x32xf32, #tpu.memory_space<vmem>>) attributes {dimension_semantics = [], scalar_prefetch = 0 : i64, scratch_operands = 0 : i64, tpu.core_type = #tpu.core_type<tc>} {
    %c0 = arith.constant 0 : index
    %c0_0 = arith.constant 0 : index
    %0 = vector.load %arg0[%c0, %c0_0] : memref<16x32xf32, #tpu.memory_space<vmem>>, vector<16x32xf32>
    %c0_1 = arith.constant 0 : index
    %c0_2 = arith.constant 0 : index
    %1 = vector.load %arg1[%c0_1, %c0_2] : memref<80x128xf32, #tpu.memory_space<vmem>>, vector<32x128xf32>
    %c32 = arith.constant 32 : index
    %c0_3 = arith.constant 0 : index
    %2 = vector.load %arg1[%c32, %c0_3] : memref<80x128xf32, #tpu.memory_space<vmem>>, vector<32x128xf32>
    %c64 = arith.constant 64 : index
    %c0_4 = arith.constant 0 : index
    %3 = vector.load %arg1[%c64, %c0_4] : memref<80x128xf32, #tpu.memory_space<vmem>>, vector<1x128xf32>
    %c72 = arith.constant 72 : index
    %c0_5 = arith.constant 0 : index
    %4 = vector.load %arg1[%c72, %c0_5] : memref<80x128xf32, #tpu.memory_space<vmem>>, vector<1x32xf32>
    %cst = arith.constant dense<0.000000e+00> : vector<16x128xf32>
    %5 = tpu.matmul %0, %1, %cst {dimension_numbers = #tpu.dot_dimension_numbers<[1], [0], [0], [1], [0, 0, 1, 1], [], []>} : vector<16x32xf32>, vector<32x128xf32>, vector<16x128xf32> -> vector<16x128xf32>
    %6 = vector.broadcast %3 : vector<1x128xf32> to vector<16x128xf32>
    %7 = arith.addf %5, %6 : vector<16x128xf32>
    %cst_6 = arith.constant 5.000000e-01 : f32
    %8 = vector.broadcast %cst_6 : f32 to vector<16x128xf32>
    %9 = arith.mulf %8, %7 : vector<16x128xf32>
    %cst_7 = arith.constant 4.471500e-02 : f32
    %10 = vector.broadcast %cst_7 : f32 to vector<16x128xf32>
    %11 = arith.mulf %10, %7 : vector<16x128xf32>
    %12 = arith.mulf %11, %7 : vector<16x128xf32>
    %13 = arith.mulf %12, %7 : vector<16x128xf32>
    %14 = arith.addf %7, %13 : vector<16x128xf32>
    %cst_8 = arith.constant 0.797884583 : f32
    %15 = vector.broadcast %cst_8 : f32 to vector<16x128xf32>
    %16 = arith.mulf %15, %14 : vector<16x128xf32>
    %17 = math.tanh %16 : vector<16x128xf32>
    %cst_9 = arith.constant 1.000000e+00 : f32
    %18 = vector.broadcast %cst_9 : f32 to vector<16x128xf32>
    %19 = arith.addf %18, %17 : vector<16x128xf32>
    %20 = arith.mulf %9, %19 : vector<16x128xf32>
    %cst_10 = arith.constant dense<0.000000e+00> : vector<16x32xf32>
    %21 = tpu.matmul %20, %2, %cst_10 {dimension_numbers = #tpu.dot_dimension_numbers<[1], [1], [0], [0], [0, 0, 1, 0], [], []>} : vector<16x128xf32>, vector<32x128xf32>, vector<16x32xf32> -> vector<16x32xf32>
    %22 = vector.broadcast %4 : vector<1x32xf32> to vector<16x32xf32>
    %23 = arith.addf %21, %22 : vector<16x32xf32>
    %c0_11 = arith.constant 0 : index
    %c0_12 = arith.constant 0 : index
    %24 = vector.load %arg2[%c0_11, %c0_12] : memref<16x32xf32, #tpu.memory_space<vmem>>, vector<16x32xf32>
    tpu.vector_store %arg2[%c0_11, %c0_12], %23 {strides = array<i32>} : memref<16x32xf32, #tpu.memory_space<vmem>>, vector<16x32xf32>,
    return
  }
}

</mosaic_0001>

<llo_original>
// kernel: tpu_custom_call.1
$region0: #{tpu_custom_call.1}
  #allocation0 [shape = 'u32[]', space=smem, size = 0x4, offset = 0x4, fixed_abs, tag = 'smem constant byte address 0x4 - core index']
  #allocation1 [shape = 'u32[144,128]{1,0:T(1,128)}', space=vmem, size = 0x12000, scoped, tag = 'internal scratch']
  %s0 = inlined_call_operand.hbm [shape: f32[16,32], index: 0, kind: input, shape index: {}]
  %s1 = inlined_call_operand.hbm [shape: f32[80,128], index: 1, kind: input, shape index: {}]
  %s2 = inlined_call_operand.hbm [shape: f32[16,32], index: 2, kind: output, shape index: {}]
  %s3 = sld [smem:[#allocation0]]
  $region26: #{tpu_custom_call.1} parent=0
    _
  %s5 = ssub.s32 1, %s3
  %s6 = scalar_select 0, %s5, %s3
  $region1: #{tpu_custom_call.1} parent=0
    #allocation2 [shape = 'u8[8192]{0}', space=vmem, size = 0x2000, scoped, tag = 'input window, operand 0, single buffered']
    #allocation3 [shape = 's32[1]{0}', space=sflag, size = 0x4, scoped, tag = 'scoped memory for tpu_custom_call.1']
    #allocation4 [shape = 's32[1]{0}', space=sflag, size = 0x4, scoped, tag = 'scoped memory for tpu_custom_call.1']
    #allocation5 [shape = 'u8[40960]{0}', space=vmem, size = 0xa000, scoped, tag = 'input window, operand 1, single buffered']
    #allocation6 [shape = 's32[1]{0}', space=sflag, size = 0x4, scoped, tag = 'scoped memory for tpu_custom_call.1']
    #allocation7 [shape = 'u8[8192]{0}', space=vmem, size = 0x2000, scoped, tag = 'output window, operand 0, single buffered']
    %7 = vsyncpa [#allocation3], 0
    %8 = vsyncpa [#allocation6], 0
    %9 = vsyncpa [#allocation4], 0
    // Predicated region
    $region2: #{tpu_custom_call.1} parent=1 // pred_check
      _
    $region3: #{tpu_custom_call.1} parent=1 // pred_check_branch
      %11 = sbr.rel (0) target = $region5
    $region4: #{tpu_custom_call.1} parent=1 // pred_region
      %s13 = ssub.s32 256, 256
      %14 = vsyncadd [#allocation3], %s13
      %s15 = sshll.u32 [#allocation2], 4
      %s16 = int_to_ptr.vmem [resolvable:$true] %s15
      %21 = dma.hbm_to_vmem [thread:$0]  %s0, 256, %s16, [#allocation3], 128, 128, 8
    $region5: #{tpu_custom_call.1} parent=1 // pred_fallthru
      _
    // Predicated region
    $region6: #{tpu_custom_call.1} parent=1 // pred_check
      _
    $region7: #{tpu_custom_call.1} parent=1 // pred_check_branch
      %23 = sbr.rel (0) target = $region9
    $region8: #{tpu_custom_call.1} parent=1 // pred_region
      %s25 = ssub.s32 1280, 1280
      %26 = vsyncadd [#allocation6], %s25
      %s27 = sshll.u32 [#allocation5], 4
      %s28 = int_to_ptr.vmem [resolvable:$true] %s27
      %33 = dma.hbm_to_vmem [thread:$0]  %s1, 1280, %s28, [#allocation6], 128, 128, 8
    $region9: #{tpu_custom_call.1} parent=1 // pred_fallthru
      _
    // Predicated region
    $region10: #{tpu_custom_call.1} parent=1 // pred_check
      _
    $region11: #{tpu_custom_call.1} parent=1 // pred_check_branch
      %35 = sbr.rel (0) target = $region13
    $region12: #{tpu_custom_call.1} parent=1 // pred_region
      %36 = dma.done [#allocation3], 256
    $region13: #{tpu_custom_call.1} parent=1 // pred_fallthru
      _
    // Predicated region
    $region14: #{tpu_custom_call.1} parent=1 // pred_check
      _
    $region15: #{tpu_custom_call.1} parent=1 // pred_check_branch
      %38 = sbr.rel (0) target = $region17
    $region16: #{tpu_custom_call.1} parent=1 // pred_region
      %39 = dma.done [#allocation6], 1280
    $region17: #{tpu_custom_call.1} parent=1 // pred_fallthru
      _
    %v40 = vld [vmem:[#allocation2] sm:$0xff]
    %v41 = vld [vmem:[#allocation2 + $0x8] sm:$0xff]
    %v42 = vld [vmem:[#allocation5] sm:$0xff]
    %v43 = vld [vmem:[#allocation5 + $0x8] sm:$0xff]
    %v44 = vld [vmem:[#allocation5 + $0x10] sm:$0xff]
    %v45 = vld [vmem:[#allocation5 + $0x18] sm:$0xff]
    %v46 = vld [vmem:[#allocation5 + $0x20] sm:$0xff]
    %v47 = vld [vmem:[#allocation5 + $0x28] sm:$0xff]
    %v48 = vld [vmem:[#allocation5 + $0x30] sm:$0xff]
    %v49 = vld [vmem:[#allocation5 + $0x38] sm:$0xff]
    %v50 = vld [vmem:[#allocation5 + $0x40] sm:$0x1]
    %v51 = vld [vmem:[#allocation5 + $0x48] sm:$0x1]
    %v52 = vlaneseq
    %v53 = vshrl.u32 %v52, 7
    %v54 = vsub.s32 0, %v53
    %v55 = vrot.slane %v50, %v54
    %vm56 = vcmask 261120
    %v58 = vsel %vm56, %v40, 0
    %v61 = vsel %vm56, %v41, 0
    %63 = vmatprep.subr.mxu0 0.0
    %64 = vmatpush1.msra.mxu0 0.0
    %65 = vmatprep.subr.mxu0 0.0
    %66 = vmatpush1.msra.mxu0 0.0
    %67 = vmatprep.subr.mxu0 0.0
    %68 = vmatpush1.msra.mxu0 0.0
    %69 = vmatprep.subr.mxu0 0.0
    %70 = vmatpush1.msra.mxu0 0.0
    %71 = vmatprep.subr.mxu0 0.0
    %72 = vmatpush1.msra.mxu0 0.0
    %73 = vmatprep.subr.mxu0 0.0
    %74 = vmatpush1.msra.mxu0 0.0
    %75 = vmatprep.subr.mxu0 0.0
    %76 = vmatpush1.msra.mxu0 0.0
    %77 = vmatprep.subr.mxu0 0.0
    %78 = vmatpush1.msra.mxu0 0.0
    %79 = vmatprep.subr.mxu0 0.0
    %80 = vmatpush1.msra.mxu0 0.0
    %81 = vmatprep.subr.mxu0 0.0
    %82 = vmatpush1.msra.mxu0 0.0
    %83 = vmatprep.subr.mxu0 0.0
    %84 = vmatpush1.msra.mxu0 0.0
    %85 = vmatprep.subr.mxu0 0.0
    %86 = vmatpush1.msra.mxu0 0.0
    %87 = vmatprep.subr.mxu0 0.0
    %88 = vmatpush1.msra.mxu0 %v45
    %89 = vmatprep.subr.mxu0 0.0
    %90 = vmatpush1.msra.mxu0 %v44
    %91 = vmatprep.subr.mxu0 0.0
    %92 = vmatpush1.msra.mxu0 %v43
    %93 = vmatprep.subr.mxu0 0.0
    %94 = vmatpush1.msra.mxu0 %v42
    %95 = vmatprep.subr.mxu0 0.0
    %96 = vmatpush2.msra.mxu0 0.0
    %97 = vmatprep.subr.mxu0 0.0
    %98 = vmatpush2.msra.mxu0 0.0
    %99 = vmatprep.subr.mxu0 0.0
    %100 = vmatpush2.msra.mxu0 0.0
    %101 = vmatprep.subr.mxu0 0.0
    %102 = vmatpush2.msra.mxu0 0.0
    %103 = vmatprep.subr.mxu0 0.0
    %104 = vmatpush2.msra.mxu0 0.0
    %105 = vmatprep.subr.mxu0 0.0
    %106 = vmatpush2.msra.mxu0 0.0
    %107 = vmatprep.subr.mxu0 0.0
    %108 = vmatpush2.msra.mxu0 0.0
    %109 = vmatprep.subr.mxu0 0.0
    %110 = vmatpush2.msra.mxu0 0.0
    %111 = vmatprep.subr.mxu0 0.0
    %112 = vmatpush2.msra.mxu0 0.0
    %113 = vmatprep.subr.mxu0 0.0
    %114 = vmatpush2.msra.mxu0 0.0
    %115 = vmatprep.subr.mxu0 0.0
    %116 = vmatpush2.msra.mxu0 0.0
    %117 = vmatprep.subr.mxu0 0.0
    %118 = vmatpush2.msra.mxu0 0.0
    %119 = vmatprep.subr.mxu0 0.0
    %120 = vmatpush2.msra.mxu0 0.0
    %121 = vmatprep.subr.mxu0 0.0
    %122 = vmatpush2.msra.mxu0 0.0
    %123 = vmatprep.subr.mxu0 0.0
    %124 = vmatpush2.msra.mxu0 0.0
    %125 = vmatprep.subr.mxu0 0.0
    %126 = vmatpush2.msra.mxu0 0.0
    %127 = vmatprep.mubr.f32.mxu0 0.0
    %128 = vmatmul.mubr.f32.gmra.mxu0 %v58
    %v129 = vpop.f32.mrf.mxu0
    %v130 = vadd.f32 %v55, %v129
    %v131 = vpop.f32.mrf.mxu0
    %132 = vmatprep.mubr.f32.mxu0 0.0
    %133 = vmatmul.mubr.f32.gmra.mxu0 %v61
    %v134 = vpop.f32.mrf.mxu0
    %v135 = vadd.f32 %v55, %v134
    %v136 = vpop.f32.mrf.mxu0
    %137 = vdwg.mxu0
    %v138 = vmul.f32 %v130, 0.5
    %v139 = vmul.f32 %v135, 0.5
    %v140 = vmul.f32 %v130, 0.044715
    %v141 = vmul.f32 %v135, 0.044715
    %v142 = vmul.f32 %v140, %v130
    %v143 = vmul.f32 %v141, %v135
    %v144 = vmul.f32 %v142, %v130
    %v145 = vmul.f32 %v143, %v135
    %v146 = vadd.f32 %v130, %v144
    %v147 = vadd.f32 %v135, %v145
    %v148 = vmul.f32 %v146, 0.7978846
    %v149 = vmul.f32 %v147, 0.7978846
    %v150 = vtanh.pop %v148
    %v151 = vtanh.pop %v149
    %v152 = vadd.f32 %v150, 1.0
    %v153 = vadd.f32 %v151, 1.0
    %v154 = vmul.f32 %v138, %v152
    %v155 = vmul.f32 %v139, %v153
    %v156 = vlaneseq
    %v157 = vshrl.u32 %v156, 7
    %v158 = vsub.s32 0, %v157
    %v159 = vrot.slane %v51, %v158
    %160 = vmatprep.subr.mxu0 0.0
    %161 = vmatpush1.xpose.msra.mxu0 0.0
    %162 = vmatprep.subr.mxu0 0.0
    %163 = vmatpush1.xpose.msra.mxu0 0.0
    %164 = vmatprep.subr.mxu0 0.0
    %165 = vmatpush1.xpose.msra.mxu0 0.0
    %166 = vmatprep.subr.mxu0 0.0
    %167 = vmatpush1.xpose.msra.mxu0 0.0
    %168 = vmatprep.subr.mxu0 0.0
    %169 = vmatpush1.xpose.msra.mxu0 0.0
    %170 = vmatprep.subr.mxu0 0.0
    %171 = vmatpush1.xpose.msra.mxu0 0.0
    %172 = vmatprep.subr.mxu0 0.0
    %173 = vmatpush1.xpose.msra.mxu0 0.0
    %174 = vmatprep.subr.mxu0 0.0
    %175 = vmatpush1.xpose.msra.mxu0 0.0
    %176 = vmatprep.subr.mxu0 0.0
    %177 = vmatpush1.xpose.msra.mxu0 0.0
    %178 = vmatprep.subr.mxu0 0.0
    %179 = vmatpush1.xpose.msra.mxu0 0.0
    %180 = vmatprep.subr.mxu0 0.0
    %181 = vmatpush1.xpose.msra.mxu0 0.0
    %182 = vmatprep.subr.mxu0 0.0
    %183 = vmatpush1.xpose.msra.mxu0 0.0
    %184 = vmatprep.subr.mxu0 0.0
    %185 = vmatpush1.xpose.msra.mxu0 %v49
    %186 = vmatprep.subr.mxu0 0.0
    %187 = vmatpush1.xpose.msra.mxu0 %v48
    %188 = vmatprep.subr.mxu0 0.0
    %189 = vmatpush1.xpose.msra.mxu0 %v47
    %190 = vmatprep.subr.mxu0 0.0
    %191 = vmatpush1.xpose.msra.mxu0 %v46
    %192 = vmatprep.subr.mxu0 0.0
    %193 = vmatpush2.xpose.msra.mxu0 0.0
    %194 = vmatprep.subr.mxu0 0.0
    %195 = vmatpush2.xpose.msra.mxu0 0.0
    %196 = vmatprep.subr.mxu0 0.0
    %197 = vmatpush2.xpose.msra.mxu0 0.0
    %198 = vmatprep.subr.mxu0 0.0
    %199 = vmatpush2.xpose.msra.mxu0 0.0
    %200 = vmatprep.subr.mxu0 0.0
    %201 = vmatpush2.xpose.msra.mxu0 0.0
    %202 = vmatprep.subr.mxu0 0.0
    %203 = vmatpush2.xpose.msra.mxu0 0.0
    %204 = vmatprep.subr.mxu0 0.0
    %205 = vmatpush2.xpose.msra.mxu0 0.0
    %206 = vmatprep.subr.mxu0 0.0
    %207 = vmatpush2.xpose.msra.mxu0 0.0
    %208 = vmatprep.subr.mxu0 0.0
    %209 = vmatpush2.xpose.msra.mxu0 0.0
    %210 = vmatprep.subr.mxu0 0.0
    %211 = vmatpush2.xpose.msra.mxu0 0.0
    %212 = vmatprep.subr.mxu0 0.0
    %213 = vmatpush2.xpose.msra.mxu0 0.0
    %214 = vmatprep.subr.mxu0 0.0
    %215 = vmatpush2.xpose.msra.mxu0 0.0
    %216 = vmatprep.subr.mxu0 0.0
    %217 = vmatpush2.xpose.msra.mxu0 0.0
    %218 = vmatprep.subr.mxu0 0.0
    %219 = vmatpush2.xpose.msra.mxu0 0.0
    %220 = vmatprep.subr.mxu0 0.0
    %221 = vmatpush2.xpose.msra.mxu0 0.0
    %222 = vmatprep.subr.mxu0 0.0
    %223 = vmatpush2.xpose.msra.mxu0 0.0
    %224 = vmatprep.mubr.f32.mxu0 0.0
    %225 = vmatmul.mubr.f32.gmra.mxu0 %v154
    %v226 = vpop.f32.mrf.mxu0
    %v227 = vadd.f32 %v159, %v226
    %v228 = vpop.f32.mrf.mxu0
    %229 = vmatprep.mubr.f32.mxu0 0.0
    %230 = vmatmul.mubr.f32.gmra.mxu0 %v155
    %v231 = vpop.f32.mrf.mxu0
    %v232 = vadd.f32 %v159, %v231
    %v233 = vpop.f32.mrf.mxu0
    %234 = vdwg.mxu0
    %235 = vst.msk [vmem:[#allocation7] sm:$0xff] %vm56, %v227
    %236 = vst.msk [vmem:[#allocation7 + $0x8] sm:$0xff] %vm56, %v232
    // Predicated region
    $region18: #{tpu_custom_call.1} parent=1 // pred_check
      _
    $region19: #{tpu_custom_call.1} parent=1 // pred_check_branch
      %238 = sbr.rel (0) target = $region21
    $region20: #{tpu_custom_call.1} parent=1 // pred_region
      %s240 = ssub.s32 256, 256
      %241 = vsyncadd [#allocation4], %s240
      %s242 = sshll.u32 [#allocation7], 4
      %s243 = int_to_ptr.vmem [resolvable:$true] %s242
      %248 = dma.vmem_to_hbm [thread:$0]  %s243, 256, %s2, [#allocation4], 128, 128, 8
    $region21: #{tpu_custom_call.1} parent=1 // pred_fallthru
      _
    // Predicated region
    $region22: #{tpu_custom_call.1} parent=1 // pred_check
      _
    $region23: #{tpu_custom_call.1} parent=1 // pred_check_branch
      %250 = sbr.rel (0) target = $region25
    $region24: #{tpu_custom_call.1} parent=1 // pred_region
      %251 = dma.done [#allocation4], 256
    $region25: #{tpu_custom_call.1} parent=1 // pred_fallthru
      _
    %252 = vsyncpa [#allocation3], 1
    %253 = vsyncpa [#allocation6], 1
    %254 = vsyncpa [#allocation4], 1

</llo_original>
